<compile_context>
chip_gen: v5e
topology: v5e:2x2
jax: 0.10.0
libtpu: 0.0.40
codegen_flags: <defaults>
</compile_context>

<pallas_src>
import math

import jax
import jax.numpy as jnp
from jax.experimental import pallas as pl
from jax.experimental.pallas import tpu as pltpu

_LANES = 128
_HALF_PI = math.pi / 2.0


def _round_up(x, m):
    return ((x + m - 1) // m) * m


def _bpe_kernel(x_ref, sw_ref, sdt_ref, bias_ref, out_ref):
    """One (TR, 128) lane-dense tile of the positional embedding.

    x_ref:    (TR, 2G)  packed [interval | position] columns per output row
    sw_ref:   (2G, 128) one-hot lane expansion * (0.5 * Wt weight)   (rows G..2G-1 zero)
    sdt_ref:  (2G, 128) one-hot lane expansion * div_term            (rows 0..G-1 zero)
    bias_ref: (1, 128)  0.5 (sigmoid offset) + {0 | pi/2} phase per lane
    out_ref:  (TR, 128) output slab tile
    """
    x = x_ref[...]
    # Lane expansion + weight/div_term multiply on the otherwise idle MXU.
    pre = jnp.dot(x, sw_ref[...], preferred_element_type=jnp.float32,
                  precision=jax.lax.Precision.HIGHEST)       # 0.5 * iv * w[h]
    arc = jnp.dot(x, sdt_ref[...], preferred_element_type=jnp.float32,
                  precision=jax.lax.Precision.HIGHEST)       # pos * div_term[h]
    # sigmoid(z) = 0.5*tanh(z/2) + 0.5 ; cos(y) = sin(y + pi/2)
    #   -> one tanh + one sin per element on the EUP.
    arg = arc + 0.5 * jnp.tanh(pre) + bias_ref[...]
    out_ref[...] = jnp.sin(arg).astype(out_ref.dtype)


def _choose_tile_rows(rows, block_rows, align):
    r_al = _round_up(max(rows, 1), align)
    tr = _round_up(max(align, min(int(block_rows), r_al)), align)
    # Keep >= 2 grid steps when there is enough work, so the "parallel" grid
    # axis can shard across v7x's two TensorCores.
    if r_al > align and pl.cdiv(r_al, tr) < 2:
        tr = max(align, _round_up(pl.cdiv(r_al, 2), align))
    # Prefer a tile that divides `rows` exactly: no pad rows -> the wrapper's
    # final reshape is a no-op instead of a full sliced copy of the output.
    if rows % align == 0:
        cand = tr
        while cand >= max(align, tr // 2):
            if rows % cand == 0:
                return cand
            cand -= align
    return tr


def biased_positional_embedding(interval, wt_weight, div_term, *,
                                block_rows=2048, out_dtype=jnp.float32):
    """Forward of D2MHP BiasedPositionalEmbedding as one Pallas TPU kernel.

    interval:  (B, L) or (L,) float32 time intervals
    wt_weight: (H,) float32   nn.Linear(1, H, bias=False).weight.squeeze(-1)
    div_term:  (H,) float32   exp(arange(0, D, 2) * -(log(10000)/D))
    Returns pe: (B, L, 2H) in out_dtype (B == 1 when interval is 1-D).
    The `position` buffer is not needed: position[l] == l is regenerated here.
    """
    if interval.ndim == 1:
        interval = interval[None, :]
    B, L = interval.shape
    H = int(wt_weight.shape[0])
    D = 2 * H
    if D > _LANES or _LANES % D != 0:
        # TODO(synk): add a plain (rows, D) layout fallback when x_dim does not divide 128.
        raise NotImplementedError("lane-dense packing requires x_dim to divide 128")
    G = _LANES // D                       # flattened (b, l) rows packed per 128-lane row

    N = B * L
    R = pl.cdiv(N, G)                     # rows of the lane-dense output slab
    align = 8 if jnp.dtype(out_dtype).itemsize >= 4 else 16
    TR = _choose_tile_rows(R, block_rows, align)
    R_pad = _round_up(R, TR)
    N_pad = R_pad * G

    # Packed [interval | position] columns: column g (resp. G+g) holds interval
    # (resp. position) for the flattened (b, l) row r*G + g.
    iv_flat = interval.reshape(-1).astype(jnp.float32)
    pos_flat = jnp.broadcast_to(
        jnp.arange(L, dtype=jnp.float32)[None, :], (B, L)).reshape(-1)
    if N_pad != N:
        iv_flat = jnp.pad(iv_flat, (0, N_pad - N))
        pos_flat = jnp.pad(pos_flat, (0, N_pad - N))
    x = jnp.concatenate(
        [iv_flat.reshape(R_pad, G), pos_flat.reshape(R_pad, G)], axis=1)   # (R_pad, 2G)

    # One-hot lane-expansion selectors (Linear weight / div_term / the 0.5 from
    # the tanh-form sigmoid folded in) and the per-lane bias (0.5 + phase) row.
    lane = jnp.arange(_LANES)
    onehot = (lane[None, :] // D == jnp.arange(G)[:, None]).astype(jnp.float32)  # (G, 128)
    h = lane % H
    sw = jnp.concatenate(
        [onehot * (0.5 * wt_weight.astype(jnp.float32))[h][None, :],
         jnp.zeros((G, _LANES), jnp.float32)], axis=0)                      # (2G, 128)
    sdt = jnp.concatenate(
        [jnp.zeros((G, _LANES), jnp.float32),
         onehot * div_term.astype(jnp.float32)[h][None, :]], axis=0)        # (2G, 128)
    bias = (0.5 + jnp.where((lane % D) < H, 0.0, _HALF_PI)
            ).astype(jnp.float32)[None, :]                                  # (1, 128)

    out = pl.pallas_call(
        _bpe_kernel,
        out_shape=jax.ShapeDtypeStruct((R_pad, _LANES), out_dtype),
        grid_spec=pltpu.PrefetchScalarGridSpec(
            num_scalar_prefetch=0,
            grid=(R_pad // TR,),
            in_specs=[
                pl.BlockSpec((TR, 2 * G), lambda t: (t, 0)),       # [iv | pos] rows
                pl.BlockSpec((2 * G, _LANES), lambda t: (0, 0)),   # Wt selector (resident)
                pl.BlockSpec((2 * G, _LANES), lambda t: (0, 0)),   # div_term selector
                pl.BlockSpec((1, _LANES), lambda t: (0, 0)),       # bias/phase row
            ],
            out_specs=pl.BlockSpec((TR, _LANES), lambda t: (t, 0)),
        ),
        compiler_params=pltpu.CompilerParams(
            dimension_semantics=("parallel",)),
    )(x, sw, sdt, bias)

    if N_pad == N:
        pe = out.reshape(B, L, D)                     # contiguous, no copy
    else:
        pe = out.reshape(-1)[: N * D].reshape(B, L, D)
    return pe


def _reference(interval, wt_weight, position, div_term):
    # Pure-JAX reference mirroring the PyTorch forward.
    phi = jax.nn.sigmoid(interval[..., None] * wt_weight[None, None, :])
    L = interval.shape[-1]
    arc = (position[:L] * div_term[None, :])[None]
    return jnp.concatenate([jnp.sin(arc + phi), jnp.cos(arc + phi)], axis=-1)


if __name__ == "__main__":
    # Small shapes consistent with the module: opt['x_dim'] = 32, seq len 8, batch 2.
    x_dim = 32
    H = x_dim // 2
    max_len = 4096

    key = jax.random.PRNGKey(0)
    k_w, k_int, k_int2 = jax.random.split(key, 3)

    # Deterministic synthetic parameters / buffers (no checkpoint load).
    wt_weight = jax.random.normal(k_w, (H,), dtype=jnp.float32) * 0.1
    position = jnp.arange(0, max_len, dtype=jnp.float32)[:, None]           # (max_len, 1)
    div_term = jnp.exp(
        jnp.arange(0, x_dim, 2, dtype=jnp.float32) * (-(math.log(10000.0) / x_dim)))

    # Test 1: toy shape (single grid step, padded slab / slice path).
    B, L = 2, 8
    interval = jax.random.uniform(k_int, (B, L), dtype=jnp.float32, maxval=5.0)
    pe = jax.block_until_ready(biased_positional_embedding(interval, wt_weight, div_term))
    ref = _reference(interval, wt_weight, position, div_term)
    assert pe.shape == (B, L, x_dim), pe.shape
    assert jnp.allclose(pe, ref, atol=3e-5, rtol=3e-5), float(jnp.max(jnp.abs(pe - ref)))

    # Test 2: larger shape -> 2 "parallel" grid steps, no pad rows (no slice copy).
    B2, L2 = 4, 32
    interval2 = jax.random.uniform(k_int2, (B2, L2), dtype=jnp.float32, maxval=5.0)
    pe2 = jax.block_until_ready(
        biased_positional_embedding(interval2, wt_weight, div_term))
    ref2 = _reference(interval2, wt_weight, position, div_term)
    assert pe2.shape == (B2, L2, x_dim), pe2.shape
    assert jnp.allclose(pe2, ref2, atol=1e-4, rtol=1e-4), float(jnp.max(jnp.abs(pe2 - ref2)))

    # Test 3: bf16 store path (for writeback-bound v5e/v6e consumers).
    pe3 = jax.block_until_ready(
        biased_positional_embedding(interval, wt_weight, div_term, out_dtype=jnp.bfloat16))
    assert pe3.dtype == jnp.bfloat16
    assert jnp.allclose(pe3.astype(jnp.float32), ref, atol=2e-2, rtol=2e-2)

    print("KERNEL_OK")
</pallas_src>

<mosaic_0001>
module attributes {stable_mosaic.version = 11 : i64} {
  func.func @_bpe_kernel(%arg0: i32, %arg1: memref<8x8xf32, #tpu.memory_space<vmem>>, %arg2: memref<8x128xf32, #tpu.memory_space<vmem>>, %arg3: memref<8x128xf32, #tpu.memory_space<vmem>>, %arg4: memref<1x128xf32, #tpu.memory_space<vmem>>, %arg5: memref<8x128xf32, #tpu.memory_space<vmem>>) attributes {dimension_semantics = [#tpu.dimension_semantics<parallel>], iteration_bounds = array<i64: 1>, scalar_prefetch = 0 : i64, scratch_operands = 0 : i64, tpu.core_type = #tpu.core_type<tc>, window_params = [{transform_indices = @transform_0, window_bounds = array<i64: 8, 8>}, {pipeline_mode = #tpu.pipeline_mode<synchronous>, transform_indices = @transform_1, window_bounds = array<i64: 8, 128>}, {pipeline_mode = #tpu.pipeline_mode<synchronous>, transform_indices = @transform_2, window_bounds = array<i64: 8, 128>}, {pipeline_mode = #tpu.pipeline_mode<synchronous>, transform_indices = @transform_3, window_bounds = array<i64: 1, 128>}, {transform_indices = @transform_4, window_bounds = array<i64: 8, 128>}]} {
    %c0 = arith.constant 0 : index
    %c0_0 = arith.constant 0 : index
    %0 = vector.load %arg1[%c0, %c0_0] : memref<8x8xf32, #tpu.memory_space<vmem>>, vector<8x8xf32>
    %c0_1 = arith.constant 0 : index
    %c0_2 = arith.constant 0 : index
    %1 = vector.load %arg2[%c0_1, %c0_2] : memref<8x128xf32, #tpu.memory_space<vmem>>, vector<8x128xf32>
    %cst = arith.constant dense<0.000000e+00> : vector<8x128xf32>
    %2 = tpu.matmul %0, %1, %cst {dimension_numbers = #tpu.dot_dimension_numbers<[1], [0], [0], [1], [0, 0, 1, 1], [], []>, precision = #tpu.contract_precision<fp32>} : vector<8x8xf32>, vector<8x128xf32>, vector<8x128xf32> -> vector<8x128xf32>
    %c0_3 = arith.constant 0 : index
    %c0_4 = arith.constant 0 : index
    %3 = vector.load %arg3[%c0_3, %c0_4] : memref<8x128xf32, #tpu.memory_space<vmem>>, vector<8x128xf32>
    %cst_5 = arith.constant dense<0.000000e+00> : vector<8x128xf32>
    %4 = tpu.matmul %0, %3, %cst_5 {dimension_numbers = #tpu.dot_dimension_numbers<[1], [0], [0], [1], [0, 0, 1, 1], [], []>, precision = #tpu.contract_precision<fp32>} : vector<8x8xf32>, vector<8x128xf32>, vector<8x128xf32> -> vector<8x128xf32>
    %5 = math.tanh %2 : vector<8x128xf32>
    %cst_6 = arith.constant 5.000000e-01 : f32
    %6 = vector.broadcast %cst_6 : f32 to vector<8x128xf32>
    %7 = arith.mulf %6, %5 : vector<8x128xf32>
    %8 = arith.addf %4, %7 : vector<8x128xf32>
    %c0_7 = arith.constant 0 : index
    %c0_8 = arith.constant 0 : index
    %9 = vector.load %arg4[%c0_7, %c0_8] : memref<1x128xf32, #tpu.memory_space<vmem>>, vector<1x128xf32>
    %10 = vector.broadcast %9 : vector<1x128xf32> to vector<8x128xf32>
    %11 = arith.addf %8, %10 : vector<8x128xf32>
    %12 = math.sin %11 : vector<8x128xf32>
    %c0_9 = arith.constant 0 : index
    %c0_10 = arith.constant 0 : index
    %13 = vector.load %arg5[%c0_9, %c0_10] : memref<8x128xf32, #tpu.memory_space<vmem>>, vector<8x128xf32>
    tpu.vector_store %arg5[%c0_9, %c0_10], %12 {strides = array<i32>} : memref<8x128xf32, #tpu.memory_space<vmem>>, vector<8x128xf32>,
    return
  }
  func.func @transform_0(%arg0: i32) -> (i32, i32) {
    %c0_i32 = arith.constant 0 : i32
    %c0_i32_0 = arith.constant 0 : i32
    return %arg0, %c0_i32 : i32, i32
  }
  func.func @transform_1(%arg0: i32) -> (i32, i32) {
    %c0_i32 = arith.constant 0 : i32
    %c0_i32_0 = arith.constant 0 : i32
    %c0_i32_1 = arith.constant 0 : i32
    return %c0_i32, %c0_i32_0 : i32, i32
  }
  func.func @transform_2(%arg0: i32) -> (i32, i32) {
    %c0_i32 = arith.constant 0 : i32
    %c0_i32_0 = arith.constant 0 : i32
    %c0_i32_1 = arith.constant 0 : i32
    return %c0_i32, %c0_i32_0 : i32, i32
  }
  func.func @transform_3(%arg0: i32) -> (i32, i32) {
    %c0_i32 = arith.constant 0 : i32
    %c0_i32_0 = arith.constant 0 : i32
    %c0_i32_1 = arith.constant 0 : i32
    return %c0_i32, %c0_i32_0 : i32, i32
  }
  func.func @transform_4(%arg0: i32) -> (i32, i32) {
    %c0_i32 = arith.constant 0 : i32
    %c0_i32_0 = arith.constant 0 : i32
    return %arg0, %c0_i32 : i32, i32
  }
}

</mosaic_0001>

<llo_original>
// kernel: tpu_custom_call.1
$region0: #{tpu_custom_call.1}
  #allocation0 [shape = 'u32[]', space=smem, size = 0x4, offset = 0x4, fixed_abs, tag = 'smem constant byte address 0x4 - core index']
  #allocation1 [shape = 'u32[72,128]{1,0:T(1,128)}', space=vmem, size = 0x9000, scoped, tag = 'internal scratch']
  %s0 = inlined_call_operand.hbm [shape: f32[8,8], index: 0, kind: input, shape index: {}]
  %s1 = inlined_call_operand.hbm [shape: f32[8,128], index: 1, kind: input, shape index: {}]
  %s2 = inlined_call_operand.hbm [shape: f32[8,128], index: 2, kind: input, shape index: {}]
  %s3 = inlined_call_operand.vmem [shape: f32[1,128], index: 3, kind: input, shape index: {}]
  %s4 = inlined_call_operand.hbm [shape: f32[8,128], index: 4, kind: output, shape index: {}]
  %s5 = sld [smem:[#allocation0]]
  $region38: #{tpu_custom_call.1} parent=0
    _
  %s7 = ssub.s32 1, %s5
  %s8 = scalar_select 0, %s7, %s5
  $region1: #{tpu_custom_call.1} parent=0
    #allocation2 [shape = 'u8[4096]{0}', space=vmem, size = 0x1000, scoped, tag = 'input window, operand 0, single buffered']
    #allocation3 [shape = 's32[1]{0}', space=sflag, size = 0x4, scoped, tag = 'scoped memory for tpu_custom_call.1']
    #allocation4 [shape = 's32[1]{0}', space=sflag, size = 0x4, scoped, tag = 'scoped memory for tpu_custom_call.1']
    #allocation5 [shape = 'u8[4096]{0}', space=vmem, size = 0x1000, scoped, tag = 'input window, operand 1, single buffered']
    #allocation6 [shape = 's32[1]{0}', space=sflag, size = 0x4, scoped, tag = 'scoped memory for tpu_custom_call.1']
    #allocation7 [shape = 'u8[4096]{0}', space=vmem, size = 0x1000, scoped, tag = 'input window, operand 2, single buffered']
    #allocation8 [shape = 'u8[4096]{0}', space=vmem, size = 0x1000, scoped, tag = 'output window, operand 0, single buffered']
    %9 = vsyncpa [#allocation3], 0
    %10 = vsyncpa [#allocation6], 0
    %11 = vsyncpa [#allocation4], 0
    // Predicated region
    $region2: #{tpu_custom_call.1} parent=1 // pred_check
      _
    $region3: #{tpu_custom_call.1} parent=1 // pred_check_branch
      %13 = sbr.rel (0) target = $region5
    $region4: #{tpu_custom_call.1} parent=1 // pred_region
      %15 = vsyncadd [#allocation3], 0
      %s17 = sshll.u32 %s0, 4
      %s18 = int_to_ptr.hbm [resolvable:$true] %s17
      %s19 = sshll.u32 [#allocation2], 4
      %s20 = int_to_ptr.vmem [resolvable:$true] %s19
      %22 = dma.hbm_to_vmem [thread:$0]  %s18, 128, %s20, [#allocation3]
    $region5: #{tpu_custom_call.1} parent=1 // pred_fallthru
      _
    // Predicated region
    $region6: #{tpu_custom_call.1} parent=1 // pred_check
      _
    $region7: #{tpu_custom_call.1} parent=1 // pred_check_branch
      %24 = sbr.rel (0) target = $region9
    $region8: #{tpu_custom_call.1} parent=1 // pred_region
      %26 = vsyncadd [#allocation6], 0
      %s28 = sshll.u32 %s1, 4
      %s29 = int_to_ptr.hbm [resolvable:$true] %s28
      %s30 = sshll.u32 [#allocation5], 4
      %s31 = int_to_ptr.vmem [resolvable:$true] %s30
      %33 = dma.hbm_to_vmem [thread:$0]  %s29, 128, %s31, [#allocation6]
    $region9: #{tpu_custom_call.1} parent=1 // pred_fallthru
      _
    // Predicated region
    $region10: #{tpu_custom_call.1} parent=1 // pred_check
      _
    $region11: #{tpu_custom_call.1} parent=1 // pred_check_branch
      %35 = sbr.rel (0) target = $region13
    $region12: #{tpu_custom_call.1} parent=1 // pred_region
      %37 = vsyncadd [#allocation6], 0
      %s39 = sshll.u32 %s2, 4
      %s40 = int_to_ptr.hbm [resolvable:$true] %s39
      %s41 = sshll.u32 [#allocation7], 4
      %s42 = int_to_ptr.vmem [resolvable:$true] %s41
      %44 = dma.hbm_to_vmem [thread:$0]  %s40, 128, %s42, [#allocation6]
    $region13: #{tpu_custom_call.1} parent=1 // pred_fallthru
      _
    // Predicated region
    $region14: #{tpu_custom_call.1} parent=1 // pred_check
      _
    $region15: #{tpu_custom_call.1} parent=1 // pred_check_branch
      %46 = sbr.rel (0) target = $region17
    $region16: #{tpu_custom_call.1} parent=1 // pred_region
      _
    $region17: #{tpu_custom_call.1} parent=1 // pred_fallthru
      _
    // Predicated region
    $region18: #{tpu_custom_call.1} parent=1 // pred_check
      _
    $region19: #{tpu_custom_call.1} parent=1 // pred_check_branch
      %48 = sbr.rel (0) target = $region21
    $region20: #{tpu_custom_call.1} parent=1 // pred_region
      %50 = dma.done [#allocation3], 128
    $region21: #{tpu_custom_call.1} parent=1 // pred_fallthru
      _
    // Predicated region
    $region22: #{tpu_custom_call.1} parent=1 // pred_check
      _
    $region23: #{tpu_custom_call.1} parent=1 // pred_check_branch
      %52 = sbr.rel (0) target = $region25
    $region24: #{tpu_custom_call.1} parent=1 // pred_region
      %54 = dma.done [#allocation6], 128
    $region25: #{tpu_custom_call.1} parent=1 // pred_fallthru
      _
    // Predicated region
    $region26: #{tpu_custom_call.1} parent=1 // pred_check
      _
    $region27: #{tpu_custom_call.1} parent=1 // pred_check_branch
      %56 = sbr.rel (0) target = $region29
    $region28: #{tpu_custom_call.1} parent=1 // pred_region
      %58 = dma.done [#allocation6], 128
    $region29: #{tpu_custom_call.1} parent=1 // pred_fallthru
      _
    %v59 = vld [vmem:[#allocation2] sm:$0xff]
    %v60 = vld [vmem:[#allocation5] sm:$0xff]
    %vm61 = vcmask 64512
    %v63 = vsel %vm61, %v59, 0
    %65 = vmatpush.msra.mxu0 0.0
    %66 = vmatpush.msra.mxu0 0.0
    %67 = vmatpush.msra.mxu0 0.0
    %68 = vmatpush.msra.mxu0 0.0
    %69 = vmatpush.msra.mxu0 0.0
    %70 = vmatpush.msra.mxu0 0.0
    %71 = vmatpush.msra.mxu0 0.0
    %72 = vmatpush.msra.mxu0 0.0
    %73 = vmatpush.msra.mxu0 0.0
    %74 = vmatpush.msra.mxu0 0.0
    %75 = vmatpush.msra.mxu0 0.0
    %76 = vmatpush.msra.mxu0 0.0
    %77 = vmatpush.msra.mxu0 0.0
    %78 = vmatpush.msra.mxu0 0.0
    %79 = vmatpush.msra.mxu0 0.0
    %v80 = vand.u32 %v60, 4294901760
    %81 = vmatpush.msra.mxu0 %v80
    %v82 = vand.u32 %v63, 4294901760
    %v83 = vsub.f32 %v63, %v82
    %v84 = vand.u32 %v83, 4294901760
    %v85 = vsub.f32 %v83, %v84
    %v86 = vand.u32 %v85, 4294901760
    %87 = vmatmul.f32.gmra.mxu0 %v86
    %v88 = vpop.f32.mrf.mxu0
    %v89 = vadd.f32 0.0, %v88
    %90 = vdwg.mxu0
    %91 = vmatpush.msra.mxu0 0.0
    %92 = vmatpush.msra.mxu0 0.0
    %93 = vmatpush.msra.mxu0 0.0
    %94 = vmatpush.msra.mxu0 0.0
    %95 = vmatpush.msra.mxu0 0.0
    %96 = vmatpush.msra.mxu0 0.0
    %97 = vmatpush.msra.mxu0 0.0
    %98 = vmatpush.msra.mxu0 0.0
    %99 = vmatpush.msra.mxu0 0.0
    %100 = vmatpush.msra.mxu0 0.0
    %101 = vmatpush.msra.mxu0 0.0
    %102 = vmatpush.msra.mxu0 0.0
    %103 = vmatpush.msra.mxu0 0.0
    %104 = vmatpush.msra.mxu0 0.0
    %105 = vmatpush.msra.mxu0 0.0
    %v106 = vand.u32 %v60, 4294901760
    %v107 = vsub.f32 %v60, %v106
    %v108 = vand.u32 %v107, 4294901760
    %v109 = vsub.f32 %v107, %v108
    %v110 = vand.u32 %v109, 4294901760
    %111 = vmatpush.msra.mxu0 %v110
    %v112 = vand.u32 %v63, 4294901760
    %113 = vmatmul.f32.gmra.mxu0 %v112
    %v114 = vpop.f32.mrf.mxu0
    %v115 = vadd.f32 %v89, %v114
    %116 = vdwg.mxu0
    %117 = vmatpush.msra.mxu0 0.0
    %118 = vmatpush.msra.mxu0 0.0
    %119 = vmatpush.msra.mxu0 0.0
    %120 = vmatpush.msra.mxu0 0.0
    %121 = vmatpush.msra.mxu0 0.0
    %122 = vmatpush.msra.mxu0 0.0
    %123 = vmatpush.msra.mxu0 0.0
    %124 = vmatpush.msra.mxu0 0.0
    %125 = vmatpush.msra.mxu0 0.0
    %126 = vmatpush.msra.mxu0 0.0
    %127 = vmatpush.msra.mxu0 0.0
    %128 = vmatpush.msra.mxu0 0.0
    %129 = vmatpush.msra.mxu0 0.0
    %130 = vmatpush.msra.mxu0 0.0
    %131 = vmatpush.msra.mxu0 0.0
    %v132 = vand.u32 %v60, 4294901760
    %v133 = vsub.f32 %v60, %v132
    %134 = vmatpush.msra.mxu0 %v133
    %v135 = vand.u32 %v63, 4294901760
    %v136 = vsub.f32 %v63, %v135
    %137 = vmatmul.f32.gmra.mxu0 %v136
    %v138 = vpop.f32.mrf.mxu0
    %v139 = vadd.f32 %v115, %v138
    %140 = vdwg.mxu0
    %141 = vmatpush.msra.mxu0 0.0
    %142 = vmatpush.msra.mxu0 0.0
    %143 = vmatpush.msra.mxu0 0.0
    %144 = vmatpush.msra.mxu0 0.0
    %145 = vmatpush.msra.mxu0 0.0
    %146 = vmatpush.msra.mxu0 0.0
    %147 = vmatpush.msra.mxu0 0.0
    %148 = vmatpush.msra.mxu0 0.0
    %149 = vmatpush.msra.mxu0 0.0
    %150 = vmatpush.msra.mxu0 0.0
    %151 = vmatpush.msra.mxu0 0.0
    %152 = vmatpush.msra.mxu0 0.0
    %153 = vmatpush.msra.mxu0 0.0
    %154 = vmatpush.msra.mxu0 0.0
    %155 = vmatpush.msra.mxu0 0.0
    %v156 = vand.u32 %v60, 4294901760
    %157 = vmatpush.msra.mxu0 %v156
    %v158 = vand.u32 %v63, 4294901760
    %v159 = vsub.f32 %v63, %v158
    %v160 = vand.u32 %v159, 4294901760
    %161 = vmatmul.f32.gmra.mxu0 %v160
    %v162 = vpop.f32.mrf.mxu0
    %v163 = vadd.f32 %v139, %v162
    %164 = vdwg.mxu0
    %165 = vmatpush.msra.mxu0 0.0
    %166 = vmatpush.msra.mxu0 0.0
    %167 = vmatpush.msra.mxu0 0.0
    %168 = vmatpush.msra.mxu0 0.0
    %169 = vmatpush.msra.mxu0 0.0
    %170 = vmatpush.msra.mxu0 0.0
    %171 = vmatpush.msra.mxu0 0.0
    %172 = vmatpush.msra.mxu0 0.0
    %173 = vmatpush.msra.mxu0 0.0
    %174 = vmatpush.msra.mxu0 0.0
    %175 = vmatpush.msra.mxu0 0.0
    %176 = vmatpush.msra.mxu0 0.0
    %177 = vmatpush.msra.mxu0 0.0
    %178 = vmatpush.msra.mxu0 0.0
    %179 = vmatpush.msra.mxu0 0.0
    %v180 = vand.u32 %v60, 4294901760
    %v181 = vsub.f32 %v60, %v180
    %v182 = vand.u32 %v181, 4294901760
    %183 = vmatpush.msra.mxu0 %v182
    %v184 = vand.u32 %v63, 4294901760
    %185 = vmatmul.f32.gmra.mxu0 %v184
    %v186 = vpop.f32.mrf.mxu0
    %v187 = vadd.f32 %v163, %v186
    %188 = vdwg.mxu0
    %189 = vmatpush.msra.mxu0 0.0
    %190 = vmatpush.msra.mxu0 0.0
    %191 = vmatpush.msra.mxu0 0.0
    %192 = vmatpush.msra.mxu0 0.0
    %193 = vmatpush.msra.mxu0 0.0
    %194 = vmatpush.msra.mxu0 0.0
    %195 = vmatpush.msra.mxu0 0.0
    %196 = vmatpush.msra.mxu0 0.0
    %197 = vmatpush.msra.mxu0 0.0
    %198 = vmatpush.msra.mxu0 0.0
    %199 = vmatpush.msra.mxu0 0.0
    %200 = vmatpush.msra.mxu0 0.0
    %201 = vmatpush.msra.mxu0 0.0
    %202 = vmatpush.msra.mxu0 0.0
    %203 = vmatpush.msra.mxu0 0.0
    %v204 = vand.u32 %v60, 4294901760
    %205 = vmatpush.msra.mxu0 %v204
    %v206 = vand.u32 %v63, 4294901760
    %207 = vmatmul.f32.gmra.mxu0 %v206
    %v208 = vpop.f32.mrf.mxu0
    %v209 = vadd.f32 %v187, %v208
    %210 = vdwg.mxu0
    %v211 = vld [vmem:[#allocation7] sm:$0xff]
    %v212 = vtanh.pop %v209
    %v213 = vmul.f32 %v212, 0.5
    %214 = vmatpush.msra.mxu0 0.0
    %215 = vmatpush.msra.mxu0 0.0
    %216 = vmatpush.msra.mxu0 0.0
    %217 = vmatpush.msra.mxu0 0.0
    %218 = vmatpush.msra.mxu0 0.0
    %219 = vmatpush.msra.mxu0 0.0
    %220 = vmatpush.msra.mxu0 0.0
    %221 = vmatpush.msra.mxu0 0.0
    %222 = vmatpush.msra.mxu0 0.0
    %223 = vmatpush.msra.mxu0 0.0
    %224 = vmatpush.msra.mxu0 0.0
    %225 = vmatpush.msra.mxu0 0.0
    %226 = vmatpush.msra.mxu0 0.0
    %227 = vmatpush.msra.mxu0 0.0
    %228 = vmatpush.msra.mxu0 0.0
    %v229 = vand.u32 %v211, 4294901760
    %230 = vmatpush.msra.mxu0 %v229
    %v231 = vand.u32 %v63, 4294901760
    %v232 = vsub.f32 %v63, %v231
    %v233 = vand.u32 %v232, 4294901760
    %v234 = vsub.f32 %v232, %v233
    %v235 = vand.u32 %v234, 4294901760
    %236 = vmatmul.f32.gmra.mxu0 %v235
    %v237 = vpop.f32.mrf.mxu0
    %v238 = vadd.f32 %v213, %v237
    %239 = vdwg.mxu0
    %240 = vmatpush.msra.mxu0 0.0
    %241 = vmatpush.msra.mxu0 0.0
    %242 = vmatpush.msra.mxu0 0.0
    %243 = vmatpush.msra.mxu0 0.0
    %244 = vmatpush.msra.mxu0 0.0
    %245 = vmatpush.msra.mxu0 0.0
    %246 = vmatpush.msra.mxu0 0.0
    %247 = vmatpush.msra.mxu0 0.0
    %248 = vmatpush.msra.mxu0 0.0
    %249 = vmatpush.msra.mxu0 0.0
    %250 = vmatpush.msra.mxu0 0.0
    %251 = vmatpush.msra.mxu0 0.0
    %252 = vmatpush.msra.mxu0 0.0
    %253 = vmatpush.msra.mxu0 0.0
    %254 = vmatpush.msra.mxu0 0.0
    %v255 = vand.u32 %v211, 4294901760
    %v256 = vsub.f32 %v211, %v255
    %v257 = vand.u32 %v256, 4294901760
    %v258 = vsub.f32 %v256, %v257
    %v259 = vand.u32 %v258, 4294901760
    %260 = vmatpush.msra.mxu0 %v259
    %v261 = vand.u32 %v63, 4294901760
    %262 = vmatmul.f32.gmra.mxu0 %v261
    %v263 = vpop.f32.mrf.mxu0
    %v264 = vadd.f32 %v238, %v263
    %265 = vdwg.mxu0
    %266 = vmatpush.msra.mxu0 0.0
    %267 = vmatpush.msra.mxu0 0.0
    %268 = vmatpush.msra.mxu0 0.0
    %269 = vmatpush.msra.mxu0 0.0
    %270 = vmatpush.msra.mxu0 0.0
    %271 = vmatpush.msra.mxu0 0.0
    %272 = vmatpush.msra.mxu0 0.0
    %273 = vmatpush.msra.mxu0 0.0
    %274 = vmatpush.msra.mxu0 0.0
    %275 = vmatpush.msra.mxu0 0.0
    %276 = vmatpush.msra.mxu0 0.0
    %277 = vmatpush.msra.mxu0 0.0
    %278 = vmatpush.msra.mxu0 0.0
    %279 = vmatpush.msra.mxu0 0.0
    %280 = vmatpush.msra.mxu0 0.0
    %v281 = vand.u32 %v211, 4294901760
    %v282 = vsub.f32 %v211, %v281
    %283 = vmatpush.msra.mxu0 %v282
    %v284 = vand.u32 %v63, 4294901760
    %v285 = vsub.f32 %v63, %v284
    %286 = vmatmul.f32.gmra.mxu0 %v285
    %v287 = vpop.f32.mrf.mxu0
    %v288 = vadd.f32 %v264, %v287
    %289 = vdwg.mxu0
    %290 = vmatpush.msra.mxu0 0.0
    %291 = vmatpush.msra.mxu0 0.0
    %292 = vmatpush.msra.mxu0 0.0
    %293 = vmatpush.msra.mxu0 0.0
    %294 = vmatpush.msra.mxu0 0.0
    %295 = vmatpush.msra.mxu0 0.0
    %296 = vmatpush.msra.mxu0 0.0
    %297 = vmatpush.msra.mxu0 0.0
    %298 = vmatpush.msra.mxu0 0.0
    %299 = vmatpush.msra.mxu0 0.0
    %300 = vmatpush.msra.mxu0 0.0
    %301 = vmatpush.msra.mxu0 0.0
    %302 = vmatpush.msra.mxu0 0.0
    %303 = vmatpush.msra.mxu0 0.0
    %304 = vmatpush.msra.mxu0 0.0
    %v305 = vand.u32 %v211, 4294901760
    %306 = vmatpush.msra.mxu0 %v305
    %v307 = vand.u32 %v63, 4294901760
    %v308 = vsub.f32 %v63, %v307
    %v309 = vand.u32 %v308, 4294901760
    %310 = vmatmul.f32.gmra.mxu0 %v309
    %v311 = vpop.f32.mrf.mxu0
    %v312 = vadd.f32 %v288, %v311
    %313 = vdwg.mxu0
    %314 = vmatpush.msra.mxu0 0.0
    %315 = vmatpush.msra.mxu0 0.0
    %316 = vmatpush.msra.mxu0 0.0
    %317 = vmatpush.msra.mxu0 0.0
    %318 = vmatpush.msra.mxu0 0.0
    %319 = vmatpush.msra.mxu0 0.0
    %320 = vmatpush.msra.mxu0 0.0
    %321 = vmatpush.msra.mxu0 0.0
    %322 = vmatpush.msra.mxu0 0.0
    %323 = vmatpush.msra.mxu0 0.0
    %324 = vmatpush.msra.mxu0 0.0
    %325 = vmatpush.msra.mxu0 0.0
    %326 = vmatpush.msra.mxu0 0.0
    %327 = vmatpush.msra.mxu0 0.0
    %328 = vmatpush.msra.mxu0 0.0
    %v329 = vand.u32 %v211, 4294901760
    %v330 = vsub.f32 %v211, %v329
    %v331 = vand.u32 %v330, 4294901760
    %332 = vmatpush.msra.mxu0 %v331
    %v333 = vand.u32 %v63, 4294901760
    %334 = vmatmul.f32.gmra.mxu0 %v333
    %v335 = vpop.f32.mrf.mxu0
    %v336 = vadd.f32 %v312, %v335
    %337 = vdwg.mxu0
    %338 = vmatpush.msra.mxu0 0.0
    %339 = vmatpush.msra.mxu0 0.0
    %340 = vmatpush.msra.mxu0 0.0
    %341 = vmatpush.msra.mxu0 0.0
    %342 = vmatpush.msra.mxu0 0.0
    %343 = vmatpush.msra.mxu0 0.0
    %344 = vmatpush.msra.mxu0 0.0
    %345 = vmatpush.msra.mxu0 0.0
    %346 = vmatpush.msra.mxu0 0.0
    %347 = vmatpush.msra.mxu0 0.0
    %348 = vmatpush.msra.mxu0 0.0
    %349 = vmatpush.msra.mxu0 0.0
    %350 = vmatpush.msra.mxu0 0.0
    %351 = vmatpush.msra.mxu0 0.0
    %352 = vmatpush.msra.mxu0 0.0
    %v353 = vand.u32 %v211, 4294901760
    %354 = vmatpush.msra.mxu0 %v353
    %v355 = vand.u32 %v63, 4294901760
    %356 = vmatmul.f32.gmra.mxu0 %v355
    %v357 = vpop.f32.mrf.mxu0
    %v358 = vadd.f32 %v336, %v357
    %359 = vdwg.mxu0
    %v360 = vld [vmem:[%s3] sm:$0x1]
    %v362 = vperm.slane %v360, 0
    %v364 = vadd.f32 %v358, %v362
    %v365 = vand.u32 2147483647, %v364
    %vm366 = vcmp.le.f32.partialorder %v365, 0.7853982
    %vm367 = vcmp.lt.s32.totalorder %v364, 0
    %v368 = vand.u32 %v364, 2139095040
    %v369 = vshrl.u32 %v368, 23
    %v370 = vsub.s32 %v369, 127
    %v371 = vand.u32 2147483647, %v364
    %v372 = vand.u32 %v371, 8388607
    %v373 = vor.u32 %v372, 8388608
    %v374 = vsub.s32 0, %v373
    %v375 = vadd.s32 %v370, 1
    %vm376 = vcmp.gt.s32.totalorder %v375, 0
    %v377 = vsel %vm376, %v375, 0
    %v378 = vshrl.u32 %v377, 5
    %v379 = vand.u32 %v377, 31
    %v380 = vsub.s32 32, %v379
    %v381 = vshrl.u32 683565275, %v380
    %v382 = vshll.u32 683565275, %v379
    %v383 = vshrl.u32 2475754826, %v380
    %v384 = vor.u32 %v382, %v383
    %v385 = vshll.u32 2475754826, %v379
    %v386 = vshrl.u32 2131351028, %v380
    %v387 = vor.u32 %v385, %v386
    %v388 = vshll.u32 2131351028, %v379
    %v389 = vshrl.u32 2102212464, %v380
    %v390 = vor.u32 %v388, %v389
    %v391 = vshll.u32 2102212464, %v379
    %v392 = vshrl.u32 920167782, %v380
    %v393 = vor.u32 %v391, %v392
    %v394 = vshll.u32 920167782, %v379
    %v395 = vshrl.u32 1326507024, %v380
    %v396 = vor.u32 %v394, %v395
    %vm397 = vcmp.lt.s32.totalorder %v378, 1
    %vm398 = vcmp.lt.s32.totalorder %v378, 2
    %vm399 = vcmp.lt.s32.totalorder %v378, 3
    %vm400 = vcmp.lt.s32.totalorder %v378, 4
    %v401 = vsel %vm397, %v381, %v384
    %v402 = vsel %vm400, %v390, 2102212464
    %v403 = vsel %vm399, %v387, %v402
    %v404 = vsel %vm398, %v401, %v403
    %v405 = vsel %vm397, %v384, %v387
    %v406 = vsel %vm400, %v393, 920167782
    %v407 = vsel %vm399, %v390, %v406
    %v408 = vsel %vm398, %v405, %v407
    %v409 = vsel %vm397, %v387, %v390
    %v410 = vsel %vm400, %v396, 1326507024
    %v411 = vsel %vm399, %v393, %v410
    %v412 = vsel %vm398, %v409, %v411
    %v413 = vshll.u32 %v373, 8
    %v414 = vand.u32 %v413, 65535
    %v415 = vshrl.u32 %v413, 16
    %v416 = vand.u32 %v412, 65535
    %v417 = vshrl.u32 %v412, 16
    %v418 = vmul.u32 %v414, %v416
    %v419 = vmul.u32 %v414, %v417
    %v420 = vmul.u32 %v415, %v416
    %v421 = vmul.u32 %v415, %v417
    %v422 = vshll.u32 %v419, 16
    %v423 = vshrl.u32 %v419, 16
    %v424 = vshll.u32 %v420, 16
    %v425 = vshrl.u32 %v420, 16
    %vm426 = vc.u32 %v418, %v422
    %v427 = vsel %vm426, 1, 0
    %v428 = vadd.s32 %v418, %v422
    %v429 = vadd.s32 %v421, %v427
    %vm430 = vc.u32 %v428, %v424
    %v431 = vsel %vm430, 1, 0
    %v432 = vadd.s32 %v428, %v424
    %v433 = vadd.s32 %v429, %v431
    %v434 = vadd.s32 %v433, %v423
    %v435 = vadd.s32 %v434, %v425
    %v436 = vand.u32 %v413, 65535
    %v437 = vshrl.u32 %v413, 16
    %v438 = vand.u32 %v408, 65535
    %v439 = vshrl.u32 %v408, 16
    %v440 = vmul.u32 %v436, %v438
    %v441 = vmul.u32 %v436, %v439
    %v442 = vmul.u32 %v437, %v438
    %v443 = vmul.u32 %v437, %v439
    %v444 = vshll.u32 %v441, 16
    %v445 = vshrl.u32 %v441, 16
    %v446 = vshll.u32 %v442, 16
    %v447 = vshrl.u32 %v442, 16
    %vm448 = vc.u32 %v440, %v444
    %v449 = vsel %vm448, 1, 0
    %v450 = vadd.s32 %v440, %v444
    %v451 = vadd.s32 %v443, %v449
    %vm452 = vc.u32 %v450, %v446
    %v453 = vsel %vm452, 1, 0
    %v454 = vadd.s32 %v450, %v446
    %v455 = vadd.s32 %v451, %v453
    %v456 = vadd.s32 %v455, %v445
    %v457 = vadd.s32 %v456, %v447
    %v458 = vmul.u32 %v413, %v404
    %v459 = vadd.s32 %v435, %v454
    %vm460 = vc.u32 %v435, %v454
    %v461 = vadd.s32 %v457, 1
    %v462 = vsel %vm460, %v461, %v457
    %v463 = vadd.s32 %v458, %v462
    %v464 = vadd.s32 %v463, 536870912
    %v465 = vshrl.u32 %v464, 30
    %v466 = vshll.u32 %v465, 30
    %v467 = vsub.s32 %v463, %v466
    %vm468 = vcmp.lt.s32.totalorder %v467, 0
    %v469 = vsub.s32 0, %v467
    %v470 = vsel %vm468, %v469, %v467
    %v471 = vclz %v470
    %v472 = vsub.s32 %v471, 2
    %vm473 = vcmp.gt.s32.totalorder 0, %v472
    %v474 = vsel %vm473, 0, %v472
    %v475 = vsub.s32 32, %v474
    %v476 = vshll.u32 %v467, %v474
    %v477 = vshrl.u32 %v459, %v475
    %v478 = vor.u32 %v476, %v477
    %v479 = vsub.s32 4294967266, %v474
    %v480 = vadd.s32 %v479, 127
    %v481 = vshll.u32 %v480, 23
    %v482 = vor.u32 4788187, %v481
    %v483 = vand.u32 2147483647, %v482
    %v485 = vcvt.s32.f32 %v478
    %v486 = vmul.f32 %v485, %v483
    %v487 = vxor.u32 %v486, 2147483648
    %v488 = vsel %vm367, %v487, %v486
    %v489 = vsub.s32 4, %v465
    %v490 = vsel %vm367, %v489, %v465
    %v491 = vsel %vm366, %v364, %v488
    %v492 = vsel %vm366, 0, %v490
    %v493 = vmul.f32 %v491, %v491
    %v494 = vmul.f32 %v493, -0.001358992
    %v495 = vadd.f32 %v494, 0.041655596
    %v496 = vmul.f32 %v493, %v495
    %v497 = vadd.f32 %v496, -0.4999988
    %v498 = vmul.f32 %v493, %v497
    %v499 = vadd.f32 1.0, %v498
    %v500 = vmul.f32 %v491, %v491
    %v501 = vmul.f32 %v500, -0.00019511016
    %v502 = vadd.f32 %v501, 0.008332121
    %v503 = vmul.f32 %v500, %v502
    %v504 = vadd.f32 %v503, -0.16666654
    %v505 = vmul.f32 %v500, %v504
    %v506 = vadd.f32 %v505, 1.0
    %v507 = vmul.f32 %v506, %v491
    %vm508 = vweird.f32 %v364
    %v509 = vadd.s32 %v492, 3
    %v510 = vand.u32 %v509, 3
    %vm511 = vcmp.lt.s32.totalorder %v510, 2
    %vm512 = vcmp.eq.s32.totalorder %v510, 0
    %v513 = vxor.u32 %v507, 2147483648
    %v514 = vsel %vm512, %v499, %v513
    %vm515 = vcmp.eq.s32.totalorder %v510, 2
    %v516 = vxor.u32 %v499, 2147483648
    %v517 = vsel %vm515, %v516, %v507
    %v518 = vsel %vm511, %v514, %v517
    %v519 = vsel %vm508, nan, %v518
    %520 = vst [vmem:[#allocation8] sm:$0xff] %v519
    // Predicated region
    $region30: #{tpu_custom_call.1} parent=1 // pred_check
      _
    $region31: #{tpu_custom_call.1} parent=1 // pred_check_branch
      %522 = sbr.rel (0) target = $region33
    $region32: #{tpu_custom_call.1} parent=1 // pred_region
      %524 = vsyncadd [#allocation4], 0
      %s526 = sshll.u32 [#allocation8], 4
      %s527 = int_to_ptr.vmem [resolvable:$true] %s526
      %s528 = sshll.u32 %s4, 4
      %s529 = int_to_ptr.hbm [resolvable:$true] %s528
      %531 = dma.vmem_to_hbm [thread:$0]  %s527, 128, %s529, [#allocation4]
    $region33: #{tpu_custom_call.1} parent=1 // pred_fallthru
      _
    // Predicated region
    $region34: #{tpu_custom_call.1} parent=1 // pred_check
      _
    $region35: #{tpu_custom_call.1} parent=1 // pred_check_branch
      %533 = sbr.rel (0) target = $region37
    $region36: #{tpu_custom_call.1} parent=1 // pred_region
      %535 = dma.done [#allocation4], 128
    $region37: #{tpu_custom_call.1} parent=1 // pred_fallthru
      _
    %536 = vsyncpa [#allocation3], 1
    %537 = vsyncpa [#allocation6], 1
    %538 = vsyncpa [#allocation4], 1

</llo_original>
